<compile_context>
chip_gen: v7x
topology: tpu7x:2x2x1
jax: 0.10.0
libtpu: 0.0.40
codegen_flags: <defaults>
</compile_context>

<pallas_src>
import functools

import jax
import jax.numpy as jnp
from jax.experimental import pallas as pl
from jax.experimental.pallas import tpu as pltpu


def _lm_crit_kernel(inp_ref, tgt_ref, msk_ref, out_ref, picked_acc, *, n_rows):
    r = pl.program_id(0)          # row-tile index (outer, parallel)
    c = pl.program_id(1)          # vocab-chunk index (inner, reduction)
    nc = pl.num_programs(1)
    tm, vc = inp_ref.shape        # (tile_rows, vocab_chunk)

    @pl.when(c == 0)
    def _():
        picked_acc[...] = jnp.zeros_like(picked_acc)

    logp = inp_ref[...]                                          # (tm, vc), input dtype
    # Local target index inside this vocab chunk: (tm, 1) vector op instead of
    # adding the chunk offset to the big (tm, vc) iota (less VALU work).
    tgt_local = tgt_ref[...] - c * vc                            # (tm, 1) i32
    col = jax.lax.broadcasted_iota(jnp.int32, (tm, vc), 1)       # local column ids
    # Padded vocab columns (col beyond V in the ragged last chunk) can never
    # match a valid target, so garbage there is never selected.
    hit = jnp.where(col == tgt_local, logp, jnp.zeros_like(logp))
    # At most one nonzero per row -> the reduce is exact even in bf16; upcast
    # only the (tm, 1) result before accumulating in f32.
    picked_acc[...] += jnp.sum(hit, axis=-1, keepdims=True).astype(jnp.float32)

    @pl.when(c == nc - 1)
    def _():
        # Row validity for the (possibly ragged) last row tile: zero out padded
        # rows so no garbage (even NaN) can reach the writeback.
        row_ids = jax.lax.broadcasted_iota(jnp.int32, (tm, 1), 0) + r * tm
        row_valid = row_ids < n_rows
        out_ref[...] = jnp.where(
            row_valid, -picked_acc[...] * msk_ref[...], 0.0)     # (tm, 1) f32


def language_model_criterion(inputs, target, mask, *,
                             tile_rows=512, tile_vocab=4096):
    """inputs: (B, T, V) log-probs (f32 or bf16); target: (B, T_t) int; mask: (B, T_t)."""
    B, T, V = inputs.shape
    # Glue: slice to the input length and flatten (matches the PyTorch view()s).
    target = target[:, :T].astype(jnp.int32)
    mask = mask[:, :T].astype(jnp.float32)

    N = B * T
    # Keep the caller's dtype for the dominant (N, V) stream (mem-bound kernel).
    inp_flat = inputs.reshape(N, V)
    tgt_flat = target.reshape(N, 1)
    msk_flat = mask.reshape(N, 1)

    # Row tile: multiple of 8 (sublanes) or the full row extent.
    if N <= tile_rows:
        tm = N
    else:
        tm = max(8, (tile_rows // 8) * 8)
    # Vocab chunk: multiple of 128 (lanes) or the full vocab extent.
    if V <= tile_vocab:
        vc = V
    else:
        vc = max(128, (tile_vocab // 128) * 128)

    nr = pl.cdiv(N, tm)
    nc = pl.cdiv(V, vc)

    itemsize = inp_flat.dtype.itemsize
    block_bytes = tm * vc * itemsize
    # Double-buffered input block + small (tm,1) buffers + slack.  Cap below
    # v7x's 64 MiB physical per-TC VMEM; floor above v5e's 16 MiB scoped default.
    vmem_limit = min(max(3 * block_bytes + (2 << 20), 16 << 20), 48 << 20)

    cost = pl.CostEstimate(
        flops=3 * N * V,                       # compare + select + add per element
        transcendentals=0,
        bytes_accessed=N * V * itemsize + N * (4 + 4) + N * 4,
    )

    per_row = pl.pallas_call(
        functools.partial(_lm_crit_kernel, n_rows=N),
        out_shape=jax.ShapeDtypeStruct((N, 1), jnp.float32),
        grid_spec=pltpu.PrefetchScalarGridSpec(
            num_scalar_prefetch=0,
            grid=(nr, nc),
            in_specs=[
                pl.BlockSpec((tm, vc), lambda r, c: (r, c)),     # log-probs (streamed)
                pl.BlockSpec((tm, 1), lambda r, c: (r, 0)),      # targets: once per row tile
                pl.BlockSpec((tm, 1), lambda r, c: (r, 0)),      # mask:    once per row tile
            ],
            # Per-row-tile output block -> no shared output, row axis can be parallel.
            out_specs=pl.BlockSpec((tm, 1), lambda r, c: (r, 0)),
            scratch_shapes=[
                pltpu.VMEM((tm, 1), jnp.float32),                # per-row picked accumulator
            ],
        ),
        compiler_params=pltpu.CompilerParams(
            # Row axis independent (megacore-shardable); vocab axis is the
            # reduction that revisits the same output block.
            dimension_semantics=("parallel", "arbitrary"),
            vmem_limit_bytes=vmem_limit,
        ),
        cost_estimate=cost,
    )(inp_flat, tgt_flat, msk_flat)

    # Tiny final reduction + divide in the wrapper (N values, negligible).
    # NOTE: sum(mask) == 0 yields NaN, matching the PyTorch module's behavior.
    return jnp.sum(per_row) / jnp.sum(msk_flat)


def _reference(inputs, target, mask):
    B, T, V = inputs.shape
    t = target[:, :T]
    m = mask[:, :T].astype(jnp.float32)
    picked = jnp.take_along_axis(inputs.astype(jnp.float32), t[..., None], axis=-1)[..., 0]
    return jnp.sum(-picked * m) / jnp.sum(m)


if __name__ == "__main__":
    key = jax.random.PRNGKey(0)
    k1, k2, k3 = jax.random.split(key, 3)

    # target/mask a bit longer than T, as in the module.
    B, T, T_t, V = 2, 12, 16, 300
    logits = jax.random.normal(k1, (B, T, V), dtype=jnp.float32)
    log_probs = jax.nn.log_softmax(logits, axis=-1)
    target = jax.random.randint(k2, (B, T_t), 0, V, dtype=jnp.int32)
    mask = (jax.random.uniform(k3, (B, T_t)) > 0.3).astype(jnp.float32)
    mask = mask.at[0, 0].set(1.0)   # ensure sum(mask) > 0

    ref = _reference(log_probs, target, mask)

    # Default (large) tiles: whole problem fits in one block.
    out1 = jax.block_until_ready(language_model_criterion(log_probs, target, mask))
    # Small tiles: exercises row tiling (ragged last row tile) + vocab chunking
    # (ragged last vocab chunk), i.e. the full multi-step grid path.
    out2 = jax.block_until_ready(
        language_model_criterion(log_probs, target, mask, tile_rows=16, tile_vocab=128))
    # bf16 log-prob path (half the HBM bytes on the dominant stream).
    log_probs_bf16 = log_probs.astype(jnp.bfloat16)
    ref_bf16 = _reference(log_probs_bf16, target, mask)
    out3 = jax.block_until_ready(
        language_model_criterion(log_probs_bf16, target, mask, tile_rows=16, tile_vocab=128))

    assert jnp.allclose(out1, ref, atol=1e-5, rtol=1e-5), (out1, ref)
    assert jnp.allclose(out2, ref, atol=1e-5, rtol=1e-5), (out2, ref)
    assert jnp.allclose(out3, ref_bf16, atol=1e-4, rtol=1e-4), (out3, ref_bf16)
    print("KERNEL_OK")
</pallas_src>

<mosaic_0001>
module attributes {stable_mosaic.version = 11 : i64} {
  func.func @_lm_crit_kernel(%arg0: i32, %arg1: i32, %arg2: memref<24x300xf32, #tpu.memory_space<vmem>>, %arg3: memref<24x1xi32, #tpu.memory_space<vmem>>, %arg4: memref<24x1xf32, #tpu.memory_space<vmem>>, %arg5: memref<24x1xf32, #tpu.memory_space<vmem>>, %arg6: memref<24x1xf32, #tpu.memory_space<vmem>>) attributes {dimension_semantics = [#tpu.dimension_semantics<parallel>, #tpu.dimension_semantics<arbitrary>], iteration_bounds = array<i64: 1, 1>, scalar_prefetch = 0 : i64, scratch_operands = 1 : i64, tpu.core_type = #tpu.core_type<tc>, window_params = [{transform_indices = @transform_0, window_bounds = array<i64: 24, 300>}, {transform_indices = @transform_1, window_bounds = array<i64: 24, 1>}, {transform_indices = @transform_2, window_bounds = array<i64: 24, 1>}, {transform_indices = @transform_3, window_bounds = array<i64: 24, 1>}]} {
    %c0_i32 = arith.constant 0 : i32
    %0 = arith.cmpi eq, %arg1, %c0_i32 : i32
    %1 = arith.extui %0 : i1 to i32
    %c0_i32_0 = arith.constant 0 : i32
    %2 = arith.cmpi ne, %1, %c0_i32_0 : i32
    scf.if %2 {
      %cst_11 = arith.constant 0.000000e+00 : f32
      %21 = vector.broadcast %cst_11 : f32 to vector<24x1xf32>
      %c0_12 = arith.constant 0 : index
      %c0_13 = arith.constant 0 : index
      %22 = vector.load %arg6[%c0_12, %c0_13] : memref<24x1xf32, #tpu.memory_space<vmem>>, vector<24x1xf32>
      tpu.vector_store %arg6[%c0_12, %c0_13], %21 {strides = array<i32>} : memref<24x1xf32, #tpu.memory_space<vmem>>, vector<24x1xf32>,
    } else {
    }
    %c0 = arith.constant 0 : index
    %c0_1 = arith.constant 0 : index
    %3 = vector.load %arg2[%c0, %c0_1] : memref<24x300xf32, #tpu.memory_space<vmem>>, vector<24x300xf32>
    %c0_2 = arith.constant 0 : index
    %c0_3 = arith.constant 0 : index
    %4 = vector.load %arg3[%c0_2, %c0_3] : memref<24x1xi32, #tpu.memory_space<vmem>>, vector<24x1xi32>
    %c300_i32 = arith.constant 300 : i32
    %5 = arith.muli %arg1, %c300_i32 : i32
    %6 = vector.broadcast %5 : i32 to vector<24x1xi32>
    %7 = arith.subi %4, %6 : vector<24x1xi32>
    %8 = tpu.iota {dimensions = array<i32: 1>} : vector<24x300xi32>
    %9 = vector.broadcast %7 : vector<24x1xi32> to vector<24x300xi32>
    %10 = arith.cmpi eq, %8, %9 : vector<24x300xi32>
    %cst = arith.constant 0.000000e+00 : f32
    %11 = vector.broadcast %cst : f32 to vector<24x300xf32>
    %12 = arith.select %10, %3, %11 : vector<24x300xi1>, vector<24x300xf32>
    %c0_4 = arith.constant 0 : index
    %c0_5 = arith.constant 0 : index
    %13 = vector.load %arg6[%c0_4, %c0_5] : memref<24x1xf32, #tpu.memory_space<vmem>>, vector<24x1xf32>
    %cst_6 = arith.constant dense<0.000000e+00> : vector<24xf32>
    %14 = vector.multi_reduction <add>, %12, %cst_6 [1] : vector<24x300xf32> to vector<24xf32>
    %15 = vector.shape_cast %14 : vector<24xf32> to vector<24x1xf32>
    %16 = arith.addf %13, %15 : vector<24x1xf32>
    %c0_7 = arith.constant 0 : index
    %c0_8 = arith.constant 0 : index
    %17 = vector.load %arg6[%c0_7, %c0_8] : memref<24x1xf32, #tpu.memory_space<vmem>>, vector<24x1xf32>
    tpu.vector_store %arg6[%c0_7, %c0_8], %16 {strides = array<i32>} : memref<24x1xf32, #tpu.memory_space<vmem>>, vector<24x1xf32>,
    %c0_i32_9 = arith.constant 0 : i32
    %18 = arith.cmpi eq, %arg1, %c0_i32_9 : i32
    %19 = arith.extui %18 : i1 to i32
    %c0_i32_10 = arith.constant 0 : i32
    %20 = arith.cmpi ne, %19, %c0_i32_10 : i32
    scf.if %20 {
      %21 = tpu.iota {dimensions = array<i32: 0>} : vector<24x1xi32>
      %c24_i32 = arith.constant 24 : i32
      %22 = arith.muli %arg0, %c24_i32 : i32
      %23 = vector.broadcast %22 : i32 to vector<24x1xi32>
      %24 = arith.addi %21, %23 : vector<24x1xi32>
      %c24_i32_11 = arith.constant 24 : i32
      %25 = vector.broadcast %c24_i32_11 : i32 to vector<24x1xi32>
      %26 = arith.cmpi slt, %24, %25 : vector<24x1xi32>
      %c0_12 = arith.constant 0 : index
      %c0_13 = arith.constant 0 : index
      %27 = vector.load %arg6[%c0_12, %c0_13] : memref<24x1xf32, #tpu.memory_space<vmem>>, vector<24x1xf32>
      %cst_14 = arith.constant 0.000000e+00 : f32
      %28 = vector.broadcast %cst_14 : f32 to vector<24x1xf32>
      %29 = arith.subf %28, %27 : vector<24x1xf32>
      %c0_15 = arith.constant 0 : index
      %c0_16 = arith.constant 0 : index
      %30 = vector.load %arg4[%c0_15, %c0_16] : memref<24x1xf32, #tpu.memory_space<vmem>>, vector<24x1xf32>
      %31 = arith.mulf %29, %30 : vector<24x1xf32>
      %cst_17 = arith.constant 0.000000e+00 : f32
      %32 = vector.broadcast %cst_17 : f32 to vector<24x1xf32>
      %33 = arith.select %26, %31, %32 : vector<24x1xi1>, vector<24x1xf32>
      %c0_18 = arith.constant 0 : index
      %c0_19 = arith.constant 0 : index
      %34 = vector.load %arg5[%c0_18, %c0_19] : memref<24x1xf32, #tpu.memory_space<vmem>>, vector<24x1xf32>
      tpu.vector_store %arg5[%c0_18, %c0_19], %33 {strides = array<i32>} : memref<24x1xf32, #tpu.memory_space<vmem>>, vector<24x1xf32>,
    } else {
    }
    return
  }
  func.func @transform_0(%arg0: i32, %arg1: i32) -> (i32, i32) {
    %c0_i32 = arith.constant 0 : i32
    return %arg0, %arg1 : i32, i32
  }
  func.func @transform_1(%arg0: i32, %arg1: i32) -> (i32, i32) {
    %c0_i32 = arith.constant 0 : i32
    %c0_i32_0 = arith.constant 0 : i32
    return %arg0, %c0_i32 : i32, i32
  }
  func.func @transform_2(%arg0: i32, %arg1: i32) -> (i32, i32) {
    %c0_i32 = arith.constant 0 : i32
    %c0_i32_0 = arith.constant 0 : i32
    return %arg0, %c0_i32 : i32, i32
  }
  func.func @transform_3(%arg0: i32, %arg1: i32) -> (i32, i32) {
    %c0_i32 = arith.constant 0 : i32
    %c0_i32_0 = arith.constant 0 : i32
    return %arg0, %c0_i32 : i32, i32
  }
}

</mosaic_0001>

<llo_original>
// kernel: tpu_custom_call.1
$region0: #{tpu_custom_call.1}
  #allocation0 [shape = 'u32[]', space=smem, size = 0x4, offset = 0x4, fixed_abs, tag = 'smem constant byte address 0x4 - core index']
  #allocation1 [shape = 'u32[144,128]{1,0:T(1,128)}', space=vmem, size = 0x12000, scoped, tag = 'internal scratch']
  #allocation2 [shape = 'f32[24,1]{1,0:T(8,128)}', space=vmem, size = 0x3000, scoped, tag = 'scratch operand']
  %s0 = inlined_call_operand.hbm [shape: f32[24,300], index: 0, kind: input, shape index: {}]
  %s1 = inlined_call_operand.vmem [shape: s32[24,1], index: 1, kind: input, shape index: {}]
  %s2 = inlined_call_operand.vmem [shape: f32[24,1], index: 2, kind: input, shape index: {}]
  %s3 = inlined_call_operand.vmem [shape: f32[24,1], index: 3, kind: output, shape index: {}]
  %s4 = sld [smem:[#allocation0]]
  $region34: #{tpu_custom_call.1} parent=0
    _
  %s6 = ssub.s32 1, %s4
  %s7 = scalar_select 0, %s6, %s4
  $region1: #{tpu_custom_call.1} parent=0
    #allocation3 [shape = 'u8[36864]{0}', space=vmem, size = 0x9000, scoped, tag = 'input window, operand 0, single buffered']
    #allocation4 [shape = 's32[1]{0}', space=sflag, size = 0x4, scoped, tag = 'scoped memory for tpu_custom_call.1']
    %8 = vsyncpa [#allocation4], 0
    // Predicated region
    $region2: #{tpu_custom_call.1} parent=1 // pred_check
      _
    $region3: #{tpu_custom_call.1} parent=1 // pred_check_branch
      %10 = sbr.rel (0) target = $region5
    $region4: #{tpu_custom_call.1} parent=1 // pred_region
      %s12 = ssub.s32 1152, 1152
      %13 = vsyncadd [#allocation4], %s12
      %s14 = sshll.u32 [#allocation3], 4
      %s15 = int_to_ptr.vmem [resolvable:$true] %s14
      %20 = dma.hbm_to_vmem [thread:$0]  %s0, 1152, %s15, [#allocation4], 384, 384, 24
    $region5: #{tpu_custom_call.1} parent=1 // pred_fallthru
      _
    // Predicated region
    $region6: #{tpu_custom_call.1} parent=1 // pred_check
      _
    $region7: #{tpu_custom_call.1} parent=1 // pred_check_branch
      %22 = sbr.rel (0) target = $region9
    $region8: #{tpu_custom_call.1} parent=1 // pred_region
      _
    $region9: #{tpu_custom_call.1} parent=1 // pred_fallthru
      _
    // Predicated region
    $region10: #{tpu_custom_call.1} parent=1 // pred_check
      _
    $region11: #{tpu_custom_call.1} parent=1 // pred_check_branch
      %24 = sbr.rel (0) target = $region13
    $region12: #{tpu_custom_call.1} parent=1 // pred_region
      _
    $region13: #{tpu_custom_call.1} parent=1 // pred_fallthru
      _
    // Predicated region
    $region14: #{tpu_custom_call.1} parent=1 // pred_check
      _
    $region15: #{tpu_custom_call.1} parent=1 // pred_check_branch
      %26 = sbr.rel (0) target = $region17
    $region16: #{tpu_custom_call.1} parent=1 // pred_region
      %27 = dma.done [#allocation4], 1152
    $region17: #{tpu_custom_call.1} parent=1 // pred_fallthru
      _
    %p28 = scmp.eq.s32.totalorder 0, 0
    // Predicated region
    $region18: #{tpu_custom_call.1} parent=1 // pred_check
      %p29 = pneg %p28
    $region19: #{tpu_custom_call.1} parent=1 // pred_check_branch
      %31 = sbr.rel (%p29) target = $region21
    $region20: #{tpu_custom_call.1} parent=1 // pred_region
      %vm32 = vcmask 7168
      %33 = vst.msk [vmem:[#allocation2] sm:$0xff] %vm32, 0.0
      %34 = vst.msk [vmem:[#allocation2 + $0x8] sm:$0xff] %vm32, 0.0
      %35 = vst.msk [vmem:[#allocation2 + $0x10] sm:$0xff] %vm32, 0.0
    $region21: #{tpu_custom_call.1} parent=1 // pred_fallthru
      _
    %v36 = vld [vmem:[#allocation3] sm:$0xff]
    %v37 = vld [vmem:[#allocation3 + $0x8] sm:$0xff]
    %v38 = vld [vmem:[#allocation3 + $0x10] sm:$0xff]
    %v39 = vld [vmem:[#allocation3 + $0x18] sm:$0xff]
    %v40 = vld [vmem:[#allocation3 + $0x20] sm:$0xff]
    %v41 = vld [vmem:[#allocation3 + $0x28] sm:$0xff]
    %v42 = vld [vmem:[#allocation3 + $0x30] sm:$0xff]
    %v43 = vld [vmem:[#allocation3 + $0x38] sm:$0xff]
    %v44 = vld [vmem:[#allocation3 + $0x40] sm:$0xff]
    %v45 = vld [vmem:[%s1] sm:$0xff]
    %v46 = vld [vmem:[%s1 + $0x8] sm:$0xff]
    %v47 = vld [vmem:[%s1 + $0x10] sm:$0xff]
    %s48 = smul.u32 0, 300
    %v49 = vstv %s48
    %v50 = vsub.s32 %v45, %v49
    %v51 = vsub.s32 %v46, %v49
    %v52 = vsub.s32 %v47, %v49
    %v53 = vlaneseq
    %v54 = vand.u32 %v53, 127
    %v55 = vadd.s32 %v54, 128
    %v56 = vadd.s32 %v54, 256
    %57 = vset.pattern.permute.xlu0 0
    %58 = vperm.xlu0 %57, %v50
    %v59 = vpop.permute.xlu0 %58
    %60 = vset.pattern.permute.xlu0 0
    %61 = vperm.xlu0 %60, %v51
    %v62 = vpop.permute.xlu0 %61
    %63 = vset.pattern.permute.xlu0 0
    %64 = vperm.xlu0 %63, %v52
    %v65 = vpop.permute.xlu0 %64
    %vm66 = vcmp.eq.s32.totalorder %v54, %v59
    %vm67 = vcmp.eq.s32.totalorder %v55, %v59
    %vm68 = vcmp.eq.s32.totalorder %v56, %v59
    %vm69 = vcmp.eq.s32.totalorder %v54, %v62
    %vm70 = vcmp.eq.s32.totalorder %v55, %v62
    %vm71 = vcmp.eq.s32.totalorder %v56, %v62
    %vm72 = vcmp.eq.s32.totalorder %v54, %v65
    %vm73 = vcmp.eq.s32.totalorder %v55, %v65
    %vm74 = vcmp.eq.s32.totalorder %v56, %v65
    %v75 = vsel %vm66, %v36, 0.0
    %v76 = vsel %vm67, %v37, 0.0
    %v77 = vsel %vm68, %v38, 0.0
    %v78 = vsel %vm69, %v39, 0.0
    %v79 = vsel %vm70, %v40, 0.0
    %v80 = vsel %vm71, %v41, 0.0
    %v81 = vsel %vm72, %v42, 0.0
    %v82 = vsel %vm73, %v43, 0.0
    %v83 = vsel %vm74, %v44, 0.0
    %v84 = vld [vmem:[#allocation2] sm:$0xff]
    %v85 = vld [vmem:[#allocation2 + $0x8] sm:$0xff]
    %v86 = vld [vmem:[#allocation2 + $0x10] sm:$0xff]
    %v87 = vadd.f32 %v75, %v76
    %vm88 = vcmask 359424
    %v89 = vsel %vm88, %v77, 0.0
    %v90 = vadd.f32 %v87, %v89
    %91 = vadd.xlane.f32.xlu0 %v90
    %v92 = vpop.xlane.xlu0 %91
    %v93 = vadd.f32 %v78, %v79
    %v94 = vsel %vm88, %v80, 0.0
    %v95 = vadd.f32 %v93, %v94
    %96 = vadd.xlane.f32.xlu0 %v95
    %v97 = vpop.xlane.xlu0 %96
    %v98 = vadd.f32 %v81, %v82
    %v99 = vsel %vm88, %v83, 0.0
    %v100 = vadd.f32 %v98, %v99
    %101 = vadd.xlane.f32.xlu0 %v100
    %v102 = vpop.xlane.xlu0 %101
    %v103 = vadd.f32 %v84, %v92
    %v104 = vadd.f32 %v85, %v97
    %v105 = vadd.f32 %v86, %v102
    %vm106 = vcmask 7168
    %107 = vst.msk [vmem:[#allocation2] sm:$0xff] %vm106, %v103
    %108 = vst.msk [vmem:[#allocation2 + $0x8] sm:$0xff] %vm106, %v104
    %109 = vst.msk [vmem:[#allocation2 + $0x10] sm:$0xff] %vm106, %v105
    // Predicated region
    $region22: #{tpu_custom_call.1} parent=1 // pred_check
      %p110 = pneg %p28
    $region23: #{tpu_custom_call.1} parent=1 // pred_check_branch
      %112 = sbr.rel (%p110) target = $region25
    $region24: #{tpu_custom_call.1} parent=1 // pred_region
      %v113 = vlaneseq
      %v114 = vshrl.u32 %v113, 7
      %v115 = vadd.s32 %v114, 8
      %v116 = vadd.s32 %v114, 16
      %s117 = smul.u32 0, 24
      %v118 = vstv %s117
      %v119 = vadd.s32 %v114, %v118
      %v120 = vadd.s32 %v115, %v118
      %v121 = vadd.s32 %v116, %v118
      %vm122 = vcmp.lt.s32.totalorder %v119, 24
      %vm123 = vcmp.lt.s32.totalorder %v120, 24
      %vm124 = vcmp.lt.s32.totalorder %v121, 24
      %v125 = vld [vmem:[#allocation2] sm:$0xff]
      %v126 = vld [vmem:[#allocation2 + $0x8] sm:$0xff]
      %v127 = vld [vmem:[#allocation2 + $0x10] sm:$0xff]
      %v128 = vsub.f32 0.0, %v125
      %v129 = vsub.f32 0.0, %v126
      %v130 = vsub.f32 0.0, %v127
      %v131 = vld [vmem:[%s2] sm:$0xff]
      %v132 = vld [vmem:[%s2 + $0x8] sm:$0xff]
      %v133 = vld [vmem:[%s2 + $0x10] sm:$0xff]
      %v134 = vmul.f32 %v128, %v131
      %v135 = vmul.f32 %v129, %v132
      %v136 = vmul.f32 %v130, %v133
      %v137 = vsel %vm122, %v134, 0.0
      %v138 = vsel %vm123, %v135, 0.0
      %v139 = vsel %vm124, %v136, 0.0
      %140 = vst.msk [vmem:[%s3] sm:$0xff] %vm106, %v137
      %141 = vst.msk [vmem:[%s3 + $0x8] sm:$0xff] %vm106, %v138
      %142 = vst.msk [vmem:[%s3 + $0x10] sm:$0xff] %vm106, %v139
    $region25: #{tpu_custom_call.1} parent=1 // pred_fallthru
      _
    // Predicated region
    $region26: #{tpu_custom_call.1} parent=1 // pred_check
      _
    $region27: #{tpu_custom_call.1} parent=1 // pred_check_branch
      %144 = sbr.rel (0) target = $region29
    $region28: #{tpu_custom_call.1} parent=1 // pred_region
      _
    $region29: #{tpu_custom_call.1} parent=1 // pred_fallthru
      _
    // Predicated region
    $region30: #{tpu_custom_call.1} parent=1 // pred_check
      _
    $region31: #{tpu_custom_call.1} parent=1 // pred_check_branch
      %146 = sbr.rel (0) target = $region33
    $region32: #{tpu_custom_call.1} parent=1 // pred_region
      _
    $region33: #{tpu_custom_call.1} parent=1 // pred_fallthru
      _
    %147 = vsyncpa [#allocation4], 1

</llo_original>
